<compile_context>
chip_gen: v6e
topology: v6e:2x2x1
jax: 0.10.0
libtpu: 0.0.40
codegen_flags: <defaults>
</compile_context>

<pallas_src>
import functools

import jax
import jax.numpy as jnp
from jax.experimental import pallas as pl
from jax.experimental.pallas import tpu as pltpu


def _round_up(v, m):
    return ((v + m - 1) // m) * m


def _gate_from_stats(s, ss, wa, ba, ws, bs, hw_real):
    """gate (C,1) from sum/sumsq (C,1); wa/ws are nn.Linear weights (out,in)."""
    hw = jnp.float32(hw_real)
    mean = s / hw                                                    # (C, 1)
    # One-pass unbiased variance; clamp tiny negative rounding error.
    # NOTE: PyTorch unbiased std is NaN when HW == 1; denominator guarded here.
    denom = jnp.float32(max(hw_real - 1, 1))
    var = jnp.maximum((ss - hw * mean * mean) / denom, 0.0)
    si = jnp.sqrt(var)                                               # (C, 1)
    avg_w = jnp.maximum(
        jnp.dot(wa, mean, preferred_element_type=jnp.float32) + ba, 0.0)
    si_w = jnp.maximum(
        jnp.dot(ws, si, preferred_element_type=jnp.float32) + bs, 0.0)
    # TODO(synk): forward() calls self.soft which is never defined in
    # __init__; the only gate defined there is nn.Sigmoid, used here.
    return jax.nn.sigmoid(avg_w + si_w)                              # (C, 1)


# --------------------------- fused single pass ------------------------------
def _fused_kernel(x_ref, wa_ref, ba_ref, ws_ref, bs_ref, o_ref, *, hw_real):
    x = x_ref[0].astype(jnp.float32)                    # (C, HWp)
    s = jnp.sum(x, axis=-1, keepdims=True)              # (C, 1)
    ss = jnp.sum(x * x, axis=-1, keepdims=True)         # (C, 1)
    gate = _gate_from_stats(s, ss, wa_ref[...], ba_ref[...],
                            ws_ref[...], bs_ref[...], hw_real)
    # Native-dtype multiply, one op per vreg; gate broadcasts over lanes.
    o_ref[...] = x_ref[...] * gate[None].astype(o_ref.dtype)


# --------------------------- streaming two pass -----------------------------
def _stats_gate_kernel(x_ref, wa_ref, ba_ref, ws_ref, bs_ref, gate_ref,
                       sum_ref, sumsq_ref, *, hw_real):
    t = pl.program_id(1)

    @pl.when(t == 0)
    def _():
        sum_ref[...] = jnp.zeros_like(sum_ref)
        sumsq_ref[...] = jnp.zeros_like(sumsq_ref)

    # Upcast per reduction tile only (no persistent f32 copy of x).
    x = x_ref[0].astype(jnp.float32)                           # (C, THW)
    sum_ref[...] += jnp.sum(x, axis=-1, keepdims=True)         # (C, 1)
    sumsq_ref[...] += jnp.sum(x * x, axis=-1, keepdims=True)   # (C, 1)

    @pl.when(t == pl.num_programs(1) - 1)
    def _():
        gate = _gate_from_stats(sum_ref[...], sumsq_ref[...], wa_ref[...],
                                ba_ref[...], ws_ref[...], bs_ref[...], hw_real)
        gate_ref[0] = gate                                     # (1, C, 1) block


def _scale_kernel(gate_ref, x_ref, o_ref):
    # Epilogue kept to one multiply (+cast) per vreg to preserve store
    # throughput (single vst slot on v5e).
    o_ref[...] = x_ref[...] * gate_ref[...].astype(o_ref.dtype)


# --------------------------------- wrapper ----------------------------------
def channel_attention(x, w_avg, b_avg, w_si, b_si, *,
                      fuse_bytes=2 << 20, block_bytes=2 << 20):
    """ChannelAttention forward. x: NCHW; Linear weights nn.Linear-style (out, in)."""
    B, C, H, W = x.shape
    HW = H * W
    itemsize = jnp.dtype(x.dtype).itemsize

    hw_128 = _round_up(HW, 128)
    xf = x.reshape(B, C, HW)

    wa = jnp.asarray(w_avg)
    ws = jnp.asarray(w_si)
    ba = jnp.asarray(b_avg).reshape(C, 1)
    bs = jnp.asarray(b_si).reshape(C, 1)

    cparams = dict(vmem_limit_bytes=32 << 20)

    # ---- Fused single-pass path: whole (C, HWp) slab per grid step. ----
    if C * hw_128 * 4 <= fuse_bytes:  # f32-equivalent slab size
        hw_pad = hw_128
        if hw_pad != HW:
            xf = jnp.pad(xf, ((0, 0), (0, 0), (0, hw_pad - HW)))
        out = pl.pallas_call(
            functools.partial(_fused_kernel, hw_real=HW),
            out_shape=jax.ShapeDtypeStruct((B, C, hw_pad), x.dtype),
            grid=(B,),
            in_specs=[
                pl.BlockSpec((1, C, hw_pad), lambda b: (b, 0, 0)),
                pl.BlockSpec((C, C), lambda b: (0, 0)),
                pl.BlockSpec((C, 1), lambda b: (0, 0)),
                pl.BlockSpec((C, C), lambda b: (0, 0)),
                pl.BlockSpec((C, 1), lambda b: (0, 0)),
            ],
            out_specs=pl.BlockSpec((1, C, hw_pad), lambda b: (b, 0, 0)),
            compiler_params=pltpu.CompilerParams(
                dimension_semantics=("parallel",), **cparams),
        )(xf, wa, ba, ws, bs)
        return out[:, :, :HW].reshape(B, C, H, W)

    # ---- Streaming two-pass path for large slabs. ----
    # Spatial tile: lane-dense multiple of 128, capped so a (1, C, THW) block
    # stays a few MiB (double-buffered input+output fits scoped VMEM).
    max_thw = max(128, (block_bytes // (C * itemsize)) // 128 * 128)
    thw = min(hw_128, max_thw)
    hw_pad = _round_up(HW, thw)
    n_hw = hw_pad // thw
    if hw_pad != HW:
        xf = jnp.pad(xf, ((0, 0), (0, 0), (0, hw_pad - HW)))

    # Pass 1: streaming sum/sumsq reduction over HW -> gate (B, C, 1).
    gate = pl.pallas_call(
        functools.partial(_stats_gate_kernel, hw_real=HW),
        out_shape=jax.ShapeDtypeStruct((B, C, 1), jnp.float32),
        grid=(B, n_hw),
        in_specs=[
            pl.BlockSpec((1, C, thw), lambda b, t: (b, 0, t)),
            pl.BlockSpec((C, C), lambda b, t: (0, 0)),
            pl.BlockSpec((C, 1), lambda b, t: (0, 0)),
            pl.BlockSpec((C, C), lambda b, t: (0, 0)),
            pl.BlockSpec((C, 1), lambda b, t: (0, 0)),
        ],
        out_specs=pl.BlockSpec((1, C, 1), lambda b, t: (b, 0, 0)),
        scratch_shapes=[pltpu.VMEM((C, 1), jnp.float32),
                        pltpu.VMEM((C, 1), jnp.float32)],
        compiler_params=pltpu.CompilerParams(
            dimension_semantics=("parallel", "arbitrary"), **cparams),
    )(xf, wa, ba, ws, bs)

    # Pass 2: fully parallel, pipelined elementwise scale in native dtype.
    out = pl.pallas_call(
        _scale_kernel,
        out_shape=jax.ShapeDtypeStruct((B, C, hw_pad), x.dtype),
        grid=(B, n_hw),
        in_specs=[
            pl.BlockSpec((1, C, 1), lambda b, t: (b, 0, 0)),
            pl.BlockSpec((1, C, thw), lambda b, t: (b, 0, t)),
        ],
        out_specs=pl.BlockSpec((1, C, thw), lambda b, t: (b, 0, t)),
        compiler_params=pltpu.CompilerParams(
            dimension_semantics=("parallel", "parallel"), **cparams),
    )(gate, xf)

    return out[:, :, :HW].reshape(B, C, H, W)


def _reference(x, w_avg, b_avg, w_si, b_si):
    B, C, H, W = x.shape
    xf = x.reshape(B, C, H * W).astype(jnp.float32)
    mean = xf.mean(-1)
    si = jnp.sqrt(((xf - mean[:, :, None]) ** 2).sum(-1) / (H * W - 1))
    avg_w = jax.nn.relu(mean @ w_avg.T + b_avg)
    si_w = jax.nn.relu(si @ w_si.T + b_si)
    gate = jax.nn.sigmoid(avg_w + si_w)
    return (gate[:, :, None, None] * x).astype(x.dtype)


if __name__ == "__main__":
    key = jax.random.PRNGKey(0)
    kx, k1, k2, k3, k4, kx2, kx3 = jax.random.split(key, 7)

    B, C, H, W = 2, 4, 16, 16
    x = jax.random.normal(kx, (B, C, H, W), dtype=jnp.float32)

    # Deterministic nn.Linear-style init: U(-1/sqrt(C), 1/sqrt(C))
    bound = 1.0 / float(C) ** 0.5
    w_avg = jax.random.uniform(k1, (C, C), jnp.float32, -bound, bound)
    b_avg = jax.random.uniform(k2, (C,), jnp.float32, -bound, bound)
    w_si = jax.random.uniform(k3, (C, C), jnp.float32, -bound, bound)
    b_si = jax.random.uniform(k4, (C,), jnp.float32, -bound, bound)

    # 1) Fused single-pass path (small slab, HW multiple of 128).
    out = jax.block_until_ready(
        jax.jit(channel_attention)(x, w_avg, b_avg, w_si, b_si))
    ref = _reference(x, w_avg, b_avg, w_si, b_si)
    assert out.shape == (B, C, H, W)
    assert jnp.allclose(out, ref, atol=2e-5, rtol=2e-5)

    # 2) Fused path with lane padding (HW not a multiple of 128).
    x3 = jax.random.normal(kx3, (B, C, 10, 10), dtype=jnp.float32)
    out3 = jax.block_until_ready(
        jax.jit(channel_attention)(x3, w_avg, b_avg, w_si, b_si))
    ref3 = _reference(x3, w_avg, b_avg, w_si, b_si)
    assert jnp.allclose(out3, ref3, atol=2e-5, rtol=2e-5)

    # 3) Streaming two-pass path (force small tiles so the HW reduction spans
    #    several grid steps).
    x2 = jax.random.normal(kx2, (B, C, 32, 32), dtype=jnp.float32)
    stream = functools.partial(channel_attention, fuse_bytes=0,
                               block_bytes=C * 128 * 4)
    out2 = jax.block_until_ready(
        jax.jit(stream)(x2, w_avg, b_avg, w_si, b_si))
    ref2 = _reference(x2, w_avg, b_avg, w_si, b_si)
    assert out2.shape == x2.shape
    assert jnp.allclose(out2, ref2, atol=2e-5, rtol=2e-5)

    print("KERNEL_OK")
</pallas_src>

<mosaic_0001>
module attributes {stable_mosaic.version = 11 : i64} {
  func.func @_fused_kernel(%arg0: i32, %arg1: memref<1x4x256xf32, #tpu.memory_space<vmem>>, %arg2: memref<4x4xf32, #tpu.memory_space<vmem>>, %arg3: memref<4x1xf32, #tpu.memory_space<vmem>>, %arg4: memref<4x4xf32, #tpu.memory_space<vmem>>, %arg5: memref<4x1xf32, #tpu.memory_space<vmem>>, %arg6: memref<1x4x256xf32, #tpu.memory_space<vmem>>) attributes {dimension_semantics = [#tpu.dimension_semantics<parallel>], iteration_bounds = array<i64: 2>, scalar_prefetch = 0 : i64, scratch_operands = 0 : i64, tpu.core_type = #tpu.core_type<tc>, window_params = [{transform_indices = @transform_0, window_bounds = array<i64: 1, 4, 256>}, {pipeline_mode = #tpu.pipeline_mode<synchronous>, transform_indices = @transform_1, window_bounds = array<i64: 4, 4>}, {pipeline_mode = #tpu.pipeline_mode<synchronous>, transform_indices = @transform_2, window_bounds = array<i64: 4, 1>}, {pipeline_mode = #tpu.pipeline_mode<synchronous>, transform_indices = @transform_3, window_bounds = array<i64: 4, 4>}, {pipeline_mode = #tpu.pipeline_mode<synchronous>, transform_indices = @transform_4, window_bounds = array<i64: 4, 1>}, {transform_indices = @transform_5, window_bounds = array<i64: 1, 4, 256>}]} {
    %c0 = arith.constant 0 : index
    %c0_0 = arith.constant 0 : index
    %c0_1 = arith.constant 0 : index
    %0 = vector.load %arg1[%c0, %c0_0, %c0_1] : memref<1x4x256xf32, #tpu.memory_space<vmem>>, vector<1x4x256xf32>
    %1 = vector.shape_cast %0 : vector<1x4x256xf32> to vector<4x256xf32>
    %cst = arith.constant dense<0.000000e+00> : vector<4xf32>
    %2 = vector.multi_reduction <add>, %1, %cst [1] : vector<4x256xf32> to vector<4xf32>
    %3 = vector.shape_cast %2 : vector<4xf32> to vector<4x1xf32>
    %4 = arith.mulf %1, %1 : vector<4x256xf32>
    %cst_2 = arith.constant dense<0.000000e+00> : vector<4xf32>
    %5 = vector.multi_reduction <add>, %4, %cst_2 [1] : vector<4x256xf32> to vector<4xf32>
    %6 = vector.shape_cast %5 : vector<4xf32> to vector<4x1xf32>
    %c0_3 = arith.constant 0 : index
    %c0_4 = arith.constant 0 : index
    %7 = vector.load %arg2[%c0_3, %c0_4] : memref<4x4xf32, #tpu.memory_space<vmem>>, vector<4x4xf32>
    %c0_5 = arith.constant 0 : index
    %c0_6 = arith.constant 0 : index
    %8 = vector.load %arg3[%c0_5, %c0_6] : memref<4x1xf32, #tpu.memory_space<vmem>>, vector<4x1xf32>
    %c0_7 = arith.constant 0 : index
    %c0_8 = arith.constant 0 : index
    %9 = vector.load %arg4[%c0_7, %c0_8] : memref<4x4xf32, #tpu.memory_space<vmem>>, vector<4x4xf32>
    %c0_9 = arith.constant 0 : index
    %c0_10 = arith.constant 0 : index
    %10 = vector.load %arg5[%c0_9, %c0_10] : memref<4x1xf32, #tpu.memory_space<vmem>>, vector<4x1xf32>
    %cst_11 = arith.constant 2.560000e+02 : f32
    %11 = vector.broadcast %cst_11 : f32 to vector<4x1xf32>
    %12 = arith.divf %3, %11 : vector<4x1xf32>
    %cst_12 = arith.constant 2.560000e+02 : f32
    %13 = vector.broadcast %cst_12 : f32 to vector<4x1xf32>
    %14 = arith.mulf %13, %12 : vector<4x1xf32>
    %15 = arith.mulf %14, %12 : vector<4x1xf32>
    %16 = arith.subf %6, %15 : vector<4x1xf32>
    %cst_13 = arith.constant 2.550000e+02 : f32
    %17 = vector.broadcast %cst_13 : f32 to vector<4x1xf32>
    %18 = arith.divf %16, %17 : vector<4x1xf32>
    %cst_14 = arith.constant 0.000000e+00 : f32
    %19 = vector.broadcast %cst_14 : f32 to vector<4x1xf32>
    %20 = arith.maximumf %18, %19 : vector<4x1xf32>
    %21 = math.sqrt %20 : vector<4x1xf32>
    %cst_15 = arith.constant dense<0.000000e+00> : vector<4x1xf32>
    %22 = tpu.matmul %7, %12, %cst_15 {dimension_numbers = #tpu.dot_dimension_numbers<[1], [0], [0], [1], [0, 0, 1, 1], [], []>} : vector<4x4xf32>, vector<4x1xf32>, vector<4x1xf32> -> vector<4x1xf32>
    %23 = arith.addf %22, %8 : vector<4x1xf32>
    %cst_16 = arith.constant 0.000000e+00 : f32
    %24 = vector.broadcast %cst_16 : f32 to vector<4x1xf32>
    %25 = arith.maximumf %23, %24 : vector<4x1xf32>
    %cst_17 = arith.constant dense<0.000000e+00> : vector<4x1xf32>
    %26 = tpu.matmul %9, %21, %cst_17 {dimension_numbers = #tpu.dot_dimension_numbers<[1], [0], [0], [1], [0, 0, 1, 1], [], []>} : vector<4x4xf32>, vector<4x1xf32>, vector<4x1xf32> -> vector<4x1xf32>
    %27 = arith.addf %26, %10 : vector<4x1xf32>
    %cst_18 = arith.constant 0.000000e+00 : f32
    %28 = vector.broadcast %cst_18 : f32 to vector<4x1xf32>
    %29 = arith.maximumf %27, %28 : vector<4x1xf32>
    %30 = arith.addf %25, %29 : vector<4x1xf32>
    %31 = arith.negf %30 : vector<4x1xf32>
    %32 = math.exp %31 : vector<4x1xf32>
    %cst_19 = arith.constant 1.000000e+00 : f32
    %33 = vector.broadcast %cst_19 : f32 to vector<4x1xf32>
    %34 = arith.addf %33, %32 : vector<4x1xf32>
    %35 = arith.divf %33, %34 : vector<4x1xf32>
    %c0_20 = arith.constant 0 : index
    %c0_21 = arith.constant 0 : index
    %c0_22 = arith.constant 0 : index
    %36 = vector.load %arg1[%c0_20, %c0_21, %c0_22] : memref<1x4x256xf32, #tpu.memory_space<vmem>>, vector<1x4x256xf32>
    %37 = vector.shape_cast %35 : vector<4x1xf32> to vector<1x4x1xf32>
    %38 = vector.broadcast %37 : vector<1x4x1xf32> to vector<1x4x256xf32>
    %39 = arith.mulf %36, %38 : vector<1x4x256xf32>
    %c0_23 = arith.constant 0 : index
    %c0_24 = arith.constant 0 : index
    %c0_25 = arith.constant 0 : index
    %40 = vector.load %arg6[%c0_23, %c0_24, %c0_25] : memref<1x4x256xf32, #tpu.memory_space<vmem>>, vector<1x4x256xf32>
    tpu.vector_store %arg6[%c0_23, %c0_24, %c0_25], %39 {strides = array<i32>} : memref<1x4x256xf32, #tpu.memory_space<vmem>>, vector<1x4x256xf32>,
    return
  }
  func.func @transform_0(%arg0: i32) -> (i32, i32, i32) {
    %c0_i32 = arith.constant 0 : i32
    %c0_i32_0 = arith.constant 0 : i32
    %c0_i32_1 = arith.constant 0 : i32
    return %arg0, %c0_i32, %c0_i32_0 : i32, i32, i32
  }
  func.func @transform_1(%arg0: i32) -> (i32, i32) {
    %c0_i32 = arith.constant 0 : i32
    %c0_i32_0 = arith.constant 0 : i32
    %c0_i32_1 = arith.constant 0 : i32
    return %c0_i32, %c0_i32_0 : i32, i32
  }
  func.func @transform_2(%arg0: i32) -> (i32, i32) {
    %c0_i32 = arith.constant 0 : i32
    %c0_i32_0 = arith.constant 0 : i32
    %c0_i32_1 = arith.constant 0 : i32
    return %c0_i32, %c0_i32_0 : i32, i32
  }
  func.func @transform_3(%arg0: i32) -> (i32, i32) {
    %c0_i32 = arith.constant 0 : i32
    %c0_i32_0 = arith.constant 0 : i32
    %c0_i32_1 = arith.constant 0 : i32
    return %c0_i32, %c0_i32_0 : i32, i32
  }
  func.func @transform_4(%arg0: i32) -> (i32, i32) {
    %c0_i32 = arith.constant 0 : i32
    %c0_i32_0 = arith.constant 0 : i32
    %c0_i32_1 = arith.constant 0 : i32
    return %c0_i32, %c0_i32_0 : i32, i32
  }
  func.func @transform_5(%arg0: i32) -> (i32, i32, i32) {
    %c0_i32 = arith.constant 0 : i32
    %c0_i32_0 = arith.constant 0 : i32
    %c0_i32_1 = arith.constant 0 : i32
    return %arg0, %c0_i32, %c0_i32_0 : i32, i32, i32
  }
}

</mosaic_0001>

<llo_original>
// kernel: channel_attention.1
$region0: #{channel_attention.1}
  #allocation0 [shape = 'u32[]', space=smem, size = 0x4, offset = 0x4, fixed_abs, tag = 'smem constant byte address 0x4 - core index']
  #allocation1 [shape = 'u32[144,128]{1,0:T(1,128)}', space=vmem, size = 0x12000, scoped, tag = 'internal scratch']
  %s0 = inlined_call_operand.vmem [shape: f32[2,4,256], index: 0, kind: input, shape index: {}]
  %s1 = inlined_call_operand.vmem [shape: f32[4,4], index: 1, kind: input, shape index: {}]
  %s2 = inlined_call_operand.vmem [shape: f32[4,1], index: 2, kind: input, shape index: {}]
  %s3 = inlined_call_operand.vmem [shape: f32[4,4], index: 3, kind: input, shape index: {}]
  %s4 = inlined_call_operand.vmem [shape: f32[4,1], index: 4, kind: input, shape index: {}]
  %s5 = inlined_call_operand.vmem [shape: f32[2,4,256], index: 5, kind: output, shape index: {}]
  %s6 = sld [smem:[#allocation0]]
  $region53: #{channel_attention.1} parent=0
    _
  %s8 = ssub.s32 1, %s6
  %s9 = scalar_select 0, %s8, %s6
  loop: start=0, step=1, limit=4
  $region2: #{channel_attention.1} parent=0 // loop_pre_header
    _
  $region3: #{channel_attention.1} parent=0 // loop_header
    %s11 = sphi 0, %s15
    %p12 = scmp.ge.s32.totalorder %s11, 4
    %s21 = sphi 0, %s23
    %s24 = sphi 0, %s21
    %s25 = sphi 0, %s24
    %s41 = sphi 0, %s25
    %s45 = sphi 0, %s45
    %s47 = sphi 0, %s45
    %s48 = sphi 0, %s47
    %s62 = sphi 0, %s48
    %s66 = sphi 0, %s66
    %s68 = sphi 0, %s66
    %s69 = sphi 0, %s68
    %s83 = sphi 0, %s69
    %s87 = sphi 0, %s87
    %s89 = sphi 0, %s87
    %s90 = sphi 0, %s89
    %s104 = sphi 0, %s90
    %s108 = sphi 0, %s108
    %s110 = sphi 0, %s108
    %s111 = sphi 0, %s110
    %s125 = sphi 0, %s111
    %s131 = sphi 0, %s133
    %s134 = sphi 0, %s131
    %s135 = sphi 0, %s134
    %s151 = sphi 0, %s135
  $region4: #{channel_attention.1} parent=0 // loop_header_branch
    %14 = sbr.rel (%p12) target = $region8
  $region5: #{channel_attention.1} parent=0 // loop_body
    %s16 = ssub.s32 %s11, 1
    %s17 = ssub.s32 %s11, 2
    %s18 = sadd.s32 %s11, 1
    %s19 = ssub.s32 %s11, %s18
    %p20 = scmp.eq.s32.totalorder %s19, 0
    %s22 = sadd.s32 %s21, 1
    %s23 = scalar_select %p20, %s21, %s22
    %p26 = pneg %p20
    %p27 = scmp.eq.s32.totalorder %s11, 1
    %p28 = por %p26, %p27
    %p29 = scmp.ne.s32.totalorder %s21, %s24
    %p30 = scmp.eq.s32.totalorder %s11, 0
    %p31 = por %p29, %p30
    %p32 = scmp.ne.s32.totalorder %s21, %s24
    %p33 = scmp.eq.s32.totalorder %s16, 1
    %p34 = por %p32, %p33
    %p35 = scmp.ne.s32.totalorder %s24, %s25
    %p36 = scmp.eq.s32.totalorder %s16, 0
    %p37 = por %p35, %p36
    %p38 = scmp.ne.s32.totalorder %s24, %s25
    %p39 = scmp.eq.s32.totalorder %s17, 1
    %p40 = por %p38, %p39
    %p42 = scmp.ne.s32.totalorder %s25, %s41
    %p43 = scmp.eq.s32.totalorder %s17, 0
    %p44 = por %p42, %p43
    %s46 = sadd.s32 %s45, 1
    %p49 = scmp.eq.s32.totalorder %s11, 1
    %p50 = scmp.ne.s32.totalorder %s45, %s47
    %p51 = scmp.eq.s32.totalorder %s11, 0
    %p52 = por %p50, %p51
    %p53 = scmp.ne.s32.totalorder %s45, %s47
    %p54 = scmp.eq.s32.totalorder %s16, 1
    %p55 = por %p53, %p54
    %p56 = scmp.ne.s32.totalorder %s47, %s48
    %p57 = scmp.eq.s32.totalorder %s16, 0
    %p58 = por %p56, %p57
    %p59 = scmp.ne.s32.totalorder %s47, %s48
    %p60 = scmp.eq.s32.totalorder %s17, 1
    %p61 = por %p59, %p60
    %p63 = scmp.ne.s32.totalorder %s48, %s62
    %p64 = scmp.eq.s32.totalorder %s17, 0
    %p65 = por %p63, %p64
    %s67 = sadd.s32 %s66, 1
    %p70 = scmp.eq.s32.totalorder %s11, 1
    %p71 = scmp.ne.s32.totalorder %s66, %s68
    %p72 = scmp.eq.s32.totalorder %s11, 0
    %p73 = por %p71, %p72
    %p74 = scmp.ne.s32.totalorder %s66, %s68
    %p75 = scmp.eq.s32.totalorder %s16, 1
    %p76 = por %p74, %p75
    %p77 = scmp.ne.s32.totalorder %s68, %s69
    %p78 = scmp.eq.s32.totalorder %s16, 0
    %p79 = por %p77, %p78
    %p80 = scmp.ne.s32.totalorder %s68, %s69
    %p81 = scmp.eq.s32.totalorder %s17, 1
    %p82 = por %p80, %p81
    %p84 = scmp.ne.s32.totalorder %s69, %s83
    %p85 = scmp.eq.s32.totalorder %s17, 0
    %p86 = por %p84, %p85
    %s88 = sadd.s32 %s87, 1
    %p91 = scmp.eq.s32.totalorder %s11, 1
    %p92 = scmp.ne.s32.totalorder %s87, %s89
    %p93 = scmp.eq.s32.totalorder %s11, 0
    %p94 = por %p92, %p93
    %p95 = scmp.ne.s32.totalorder %s87, %s89
    %p96 = scmp.eq.s32.totalorder %s16, 1
    %p97 = por %p95, %p96
    %p98 = scmp.ne.s32.totalorder %s89, %s90
    %p99 = scmp.eq.s32.totalorder %s16, 0
    %p100 = por %p98, %p99
    %p101 = scmp.ne.s32.totalorder %s89, %s90
    %p102 = scmp.eq.s32.totalorder %s17, 1
    %p103 = por %p101, %p102
    %p105 = scmp.ne.s32.totalorder %s90, %s104
    %p106 = scmp.eq.s32.totalorder %s17, 0
    %p107 = por %p105, %p106
    %s109 = sadd.s32 %s108, 1
    %p112 = scmp.eq.s32.totalorder %s11, 1
    %p113 = scmp.ne.s32.totalorder %s108, %s110
    %p114 = scmp.eq.s32.totalorder %s11, 0
    %p115 = por %p113, %p114
    %p116 = scmp.ne.s32.totalorder %s108, %s110
    %p117 = scmp.eq.s32.totalorder %s16, 1
    %p118 = por %p116, %p117
    %p119 = scmp.ne.s32.totalorder %s110, %s111
    %p120 = scmp.eq.s32.totalorder %s16, 0
    %p121 = por %p119, %p120
    %p122 = scmp.ne.s32.totalorder %s110, %s111
    %p123 = scmp.eq.s32.totalorder %s17, 1
    %p124 = por %p122, %p123
    %p126 = scmp.ne.s32.totalorder %s111, %s125
    %p127 = scmp.eq.s32.totalorder %s17, 0
    %p128 = por %p126, %p127
    %s129 = ssub.s32 %s11, %s18
    %p130 = scmp.eq.s32.totalorder %s129, 0
    %s132 = sadd.s32 %s131, 1
    %s133 = scalar_select %p130, %s131, %s132
    %p136 = pneg %p130
    %p137 = scmp.eq.s32.totalorder %s11, 1
    %p138 = por %p136, %p137
    %p139 = scmp.ne.s32.totalorder %s131, %s134
    %p140 = scmp.eq.s32.totalorder %s11, 0
    %p141 = por %p139, %p140
    %p142 = scmp.ne.s32.totalorder %s131, %s134
    %p143 = scmp.eq.s32.totalorder %s16, 1
    %p144 = por %p142, %p143
    %p145 = scmp.ne.s32.totalorder %s134, %s135
    %p146 = scmp.eq.s32.totalorder %s16, 0
    %p147 = por %p145, %p146
    %p148 = scmp.ne.s32.totalorder %s134, %s135
    %p149 = scmp.eq.s32.totalorder %s17, 1
    %p150 = por %p148, %p149
    %p152 = scmp.ne.s32.totalorder %s135, %s151
    %p153 = scmp.eq.s32.totalorder %s17, 0
    %p154 = por %p152, %p153
    %p155 = scmp.le.s32.totalorder 1, %s11
    %p156 = scmp.lt.s32.totalorder %s11, 3
    %p157 = pnand %p155, %p156
    %p158 = pneg %p157
    // Predicated region
    $region9: #{channel_attention.1} parent=5 // pred_check
      _
    $region10: #{channel_attention.1} parent=5 // pred_check_branch
      %160 = sbr.rel (%p157) target = $region12
    $region11: #{channel_attention.1} parent=5 // pred_region
      %s161 = ssub.s32 %s11, 1
      // Predicated region
      $region13: #{channel_attention.1} parent=11 // pred_check
        %p162 = pneg %p58
      $region14: #{channel_attention.1} parent=11 // pred_check_branch
        %164 = sbr.rel (%p162) target = $region16
      $region15: #{channel_attention.1} parent=11 // pred_region
        _
      $region16: #{channel_attention.1} parent=11 // pred_fallthru
        _
      // Predicated region
      $region17: #{channel_attention.1} parent=11 // pred_check
        %p165 = pneg %p79
      $region18: #{channel_attention.1} parent=11 // pred_check_branch
        %167 = sbr.rel (%p165) target = $region20
      $region19: #{channel_attention.1} parent=11 // pred_region
        _
      $region20: #{channel_attention.1} parent=11 // pred_fallthru
        _
      // Predicated region
      $region21: #{channel_attention.1} parent=11 // pred_check
        %p168 = pneg %p100
      $region22: #{channel_attention.1} parent=11 // pred_check_branch
        %170 = sbr.rel (%p168) target = $region24
      $region23: #{channel_attention.1} parent=11 // pred_region
        _
      $region24: #{channel_attention.1} parent=11 // pred_fallthru
        _
      // Predicated region
      $region25: #{channel_attention.1} parent=11 // pred_check
        %p171 = pneg %p121
      $region26: #{channel_attention.1} parent=11 // pred_check_branch
        %173 = sbr.rel (%p171) target = $region28
      $region27: #{channel_attention.1} parent=11 // pred_region
        _
      $region28: #{channel_attention.1} parent=11 // pred_fallthru
        _
    $region12: #{channel_attention.1} parent=5 // pred_fallthru
      _
    %p174 = scmp.lt.s32.totalorder %s11, 2
    // Predicated region
    $region29: #{channel_attention.1} parent=5 // pred_check
      %p175 = pneg %p174
    $region30: #{channel_attention.1} parent=5 // pred_check_branch
      %177 = sbr.rel (%p175) target = $region32
    $region31: #{channel_attention.1} parent=5 // pred_region
      // Predicated region
      $region33: #{channel_attention.1} parent=31 // pred_check
        %p178 = pneg %p31
      $region34: #{channel_attention.1} parent=31 // pred_check_branch
        %180 = sbr.rel (%p178) target = $region36
      $region35: #{channel_attention.1} parent=31 // pred_region
        %p181 = scmp.lt.s32.totalorder %s11, 1
        %s182 = scalar_select %p181, %s11, 1
        %s183 = smul.addr %s182, 2
        %s184 = smul.addr %s183, 4
        %s185 = scalar_lea.vmem %s0, %s184
      $region36: #{channel_attention.1} parent=31 // pred_fallthru
        _
    $region32: #{channel_attention.1} parent=5 // pred_fallthru
      _
    %p186 = scmp.le.s32.totalorder 1, %s11
    %p187 = scmp.lt.s32.totalorder %s11, 3
    %p188 = pnand %p186, %p187
    %p189 = pneg %p188
    // Predicated region
    $region37: #{channel_attention.1} parent=5 // pred_check
      _
    $region38: #{channel_attention.1} parent=5 // pred_check_branch
      %191 = sbr.rel (%p188) target = $region40
    $region39: #{channel_attention.1} parent=5 // pred_region
      %s192 = ssub.s32 %s11, 1
      %p193 = scmp.lt.s32.totalorder %s16, 1
      %s194 = scalar_select %p193, %s16, 1
      %s195 = smul.addr %s194, 2
      %s196 = smul.addr %s195, 4
      %s197 = scalar_lea.vmem %s0, %s196
      %p198 = pneg %p37
      %p199 = pneg %p34
      %p200 = pneg %p58
      %p201 = pneg %p55
      %p202 = pneg %p79
      %p203 = pneg %p76
      %p204 = pneg %p100
      %p205 = pneg %p97
      %p206 = pneg %p121
      %p207 = pneg %p118
      %p208 = pneg %p147
      %p209 = pneg %p144
      %p210 = scmp.lt.s32.totalorder %s16, 1
      %s211 = scalar_select %p210, %s16, 1
      %s212 = smul.addr %s211, 2
      %s213 = smul.addr %s212, 4
      %s214 = scalar_lea.vmem %s5, %s213
      %p215 = scmp.lt.s32.totalorder %s16, 1
      %s216 = scalar_select %p215, %s16, 1
      %s217 = smul.addr %s216, 2
      %s218 = smul.addr %s217, 4
      %s219 = scalar_lea.vmem %s0, %s218
      %p220 = scmp.lt.s32.totalorder %s16, 1
      %s221 = scalar_select %p220, %s16, 1
      %s222 = smul.addr %s221, 2
      %s223 = smul.addr %s222, 4
      %s224 = scalar_lea.vmem %s5, %s223
      %v225 = vld [vmem:[%s219] sm:$0xff]
      %v227 = vcombine.high %v225, %v225
      %vm229 = vcmask 1043456
      %v230 = vsel %vm229, %v225, 0.0
      %v231 = vsel %vm229, %v227, 0.0
      %v232 = vadd.f32 %v230, %v231
      %233 = vadd.xlane.f32.xlu0 %v232
      %v234 = vpop.xlane.xlu0 %233
      %v235 = vmul.f32 %v225, %v225
      %v237 = vcombine.high %v235, %v235
      %v239 = vsel %vm229, %v235, 0.0
      %v240 = vsel %vm229, %v237, 0.0
      %v241 = vadd.f32 %v239, %v240
      %242 = vadd.xlane.f32.xlu0 %v241
      %v243 = vpop.xlane.xlu0 %242
      %v244 = vld [vmem:[%s1] sm:$0xf]
      %v245 = vld [vmem:[%s2] sm:$0xf]
      %v246 = vld [vmem:[%s3] sm:$0xf]
      %v247 = vld [vmem:[%s4] sm:$0xf]
      %v248 = vrcp.pop 256.0
      %v249 = vmul.f32 %v234, %v248
      %v250 = vmul.f32 %v249, 256.0
      %v251 = vmul.f32 %v250, %v249
      %v252 = vsub.f32 %v243, %v251
      %v253 = vrcp.pop 255.0
      %v254 = vmul.f32 %v252, %v253
      %v255 = vmax.f32 %v254, 0.0
      %v256 = vrsqrt.pop %v255
      %v257 = vmul.f32 %v255, %v256
      %vm258 = vcmp.eq.f32.partialorder %v255, inf
      %v259 = vsel %vm258, %v255, %v257
      %vm260 = vcmp.eq.f32.partialorder %v255, 0.0
      %v261 = vand.u32 %v255, 2147483648
      %v262 = vsel %vm260, %v261, %v259
      %vm263 = vcmask 31744
      %v265 = vsel %vm263, %v244, 0
      %v268 = vsel %vm229, %v249, 0
      %270 = vmatprep.subr.mxu0 0.0
      %271 = vmatpush1.msra.mxu0 0.0
      %272 = vmatprep.subr.mxu0 0.0
      %273 = vmatpush1.msra.mxu0 0.0
      %274 = vmatprep.subr.mxu0 0.0
      %275 = vmatpush1.msra.mxu0 0.0
      %276 = vmatprep.subr.mxu0 0.0
      %277 = vmatpush1.msra.mxu0 0.0
      %278 = vmatprep.subr.mxu0 0.0
      %279 = vmatpush1.msra.mxu0 0.0
      %280 = vmatprep.subr.mxu0 0.0
      %281 = vmatpush1.msra.mxu0 0.0
      %282 = vmatprep.subr.mxu0 0.0
      %283 = vmatpush1.msra.mxu0 0.0
      %284 = vmatprep.subr.mxu0 0.0
      %285 = vmatpush1.msra.mxu0 0.0
      %286 = vmatprep.subr.mxu0 0.0
      %287 = vmatpush1.msra.mxu0 0.0
      %288 = vmatprep.subr.mxu0 0.0
      %289 = vmatpush1.msra.mxu0 0.0
      %290 = vmatprep.subr.mxu0 0.0
      %291 = vmatpush1.msra.mxu0 0.0
      %292 = vmatprep.subr.mxu0 0.0
      %293 = vmatpush1.msra.mxu0 0.0
      %294 = vmatprep.subr.mxu0 0.0
      %295 = vmatpush1.msra.mxu0 0.0
      %296 = vmatprep.subr.mxu0 0.0
      %297 = vmatpush1.msra.mxu0 0.0
      %298 = vmatprep.subr.mxu0 0.0
      %299 = vmatpush1.msra.mxu0 0.0
      %300 = vmatprep.subr.mxu0 0.0
      %301 = vmatpush1.msra.mxu0 %v268
      %302 = vmatprep.subr.mxu0 0.0
      %303 = vmatpush2.msra.mxu0 0.0
      %304 = vmatprep.subr.mxu0 0.0
      %305 = vmatpush2.msra.mxu0 0.0
      %306 = vmatprep.subr.mxu0 0.0
      %307 = vmatpush2.msra.mxu0 0.0
      %308 = vmatprep.subr.mxu0 0.0
      %309 = vmatpush2.msra.mxu0 0.0
      %310 = vmatprep.subr.mxu0 0.0
      %311 = vmatpush2.msra.mxu0 0.0
      %312 = vmatprep.subr.mxu0 0.0
      %313 = vmatpush2.msra.mxu0 0.0
      %314 = vmatprep.subr.mxu0 0.0
      %315 = vmatpush2.msra.mxu0 0.0
      %316 = vmatprep.subr.mxu0 0.0
      %317 = vmatpush2.msra.mxu0 0.0
      %318 = vmatprep.subr.mxu0 0.0
      %319 = vmatpush2.msra.mxu0 0.0
      %320 = vmatprep.subr.mxu0 0.0
      %321 = vmatpush2.msra.mxu0 0.0
      %322 = vmatprep.subr.mxu0 0.0
      %323 = vmatpush2.msra.mxu0 0.0
      %324 = vmatprep.subr.mxu0 0.0
      %325 = vmatpush2.msra.mxu0 0.0
      %326 = vmatprep.subr.mxu0 0.0
      %327 = vmatpush2.msra.mxu0 0.0
      %328 = vmatprep.subr.mxu0 0.0
      %329 = vmatpush2.msra.mxu0 0.0
      %330 = vmatprep.subr.mxu0 0.0
      %331 = vmatpush2.msra.mxu0 0.0
      %332 = vmatprep.subr.mxu0 0.0
      %333 = vmatpush2.msra.mxu0 0.0
      %334 = vmatprep.mubr.f32.mxu0 0.0
      %335 = vmatmul.mubr.f32.gmra.mxu0 %v265
      %v336 = vpop.f32.mrf.mxu0
      %v337 = vadd.f32 %v245, %v336
      %v338 = vpop.f32.mrf.mxu0
      %339 = vdwg.mxu0
      %v340 = vmax.f32 %v337, 0.0
      %v342 = vsel %vm263, %v246, 0
      %v345 = vsel %vm229, %v262, 0
      %347 = vmatprep.subr.mxu0 0.0
      %348 = vmatpush1.msra.mxu0 0.0
      %349 = vmatprep.subr.mxu0 0.0
      %350 = vmatpush1.msra.mxu0 0.0
      %351 = vmatprep.subr.mxu0 0.0
      %352 = vmatpush1.msra.mxu0 0.0
      %353 = vmatprep.subr.mxu0 0.0
      %354 = vmatpush1.msra.mxu0 0.0
      %355 = vmatprep.subr.mxu0 0.0
      %356 = vmatpush1.msra.mxu0 0.0
      %357 = vmatprep.subr.mxu0 0.0
      %358 = vmatpush1.msra.mxu0 0.0
      %359 = vmatprep.subr.mxu0 0.0
      %360 = vmatpush1.msra.mxu0 0.0
      %361 = vmatprep.subr.mxu0 0.0
      %362 = vmatpush1.msra.mxu0 0.0
      %363 = vmatprep.subr.mxu0 0.0
      %364 = vmatpush1.msra.mxu0 0.0
      %365 = vmatprep.subr.mxu0 0.0
      %366 = vmatpush1.msra.mxu0 0.0
      %367 = vmatprep.subr.mxu0 0.0
      %368 = vmatpush1.msra.mxu0 0.0
      %369 = vmatprep.subr.mxu0 0.0
      %370 = vmatpush1.msra.mxu0 0.0
      %371 = vmatprep.subr.mxu0 0.0
      %372 = vmatpush1.msra.mxu0 0.0
      %373 = vmatprep.subr.mxu0 0.0
      %374 = vmatpush1.msra.mxu0 0.0
      %375 = vmatprep.subr.mxu0 0.0
      %376 = vmatpush1.msra.mxu0 0.0
      %377 = vmatprep.subr.mxu0 0.0
      %378 = vmatpush1.msra.mxu0 %v345
      %379 = vmatprep.subr.mxu0 0.0
      %380 = vmatpush2.msra.mxu0 0.0
      %381 = vmatprep.subr.mxu0 0.0
      %382 = vmatpush2.msra.mxu0 0.0
      %383 = vmatprep.subr.mxu0 0.0
      %384 = vmatpush2.msra.mxu0 0.0
      %385 = vmatprep.subr.mxu0 0.0
      %386 = vmatpush2.msra.mxu0 0.0
      %387 = vmatprep.subr.mxu0 0.0
      %388 = vmatpush2.msra.mxu0 0.0
      %389 = vmatprep.subr.mxu0 0.0
      %390 = vmatpush2.msra.mxu0 0.0
      %391 = vmatprep.subr.mxu0 0.0
      %392 = vmatpush2.msra.mxu0 0.0
      %393 = vmatprep.subr.mxu0 0.0
      %394 = vmatpush2.msra.mxu0 0.0
      %395 = vmatprep.subr.mxu0 0.0
      %396 = vmatpush2.msra.mxu0 0.0
      %397 = vmatprep.subr.mxu0 0.0
      %398 = vmatpush2.msra.mxu0 0.0
      %399 = vmatprep.subr.mxu0 0.0
      %400 = vmatpush2.msra.mxu0 0.0
      %401 = vmatprep.subr.mxu0 0.0
      %402 = vmatpush2.msra.mxu0 0.0
      %403 = vmatprep.subr.mxu0 0.0
      %404 = vmatpush2.msra.mxu0 0.0
      %405 = vmatprep.subr.mxu0 0.0
      %406 = vmatpush2.msra.mxu0 0.0
      %407 = vmatprep.subr.mxu0 0.0
      %408 = vmatpush2.msra.mxu0 0.0
      %409 = vmatprep.subr.mxu0 0.0
      %410 = vmatpush2.msra.mxu0 0.0
      %411 = vmatprep.mubr.f32.mxu0 0.0
      %412 = vmatmul.mubr.f32.gmra.mxu0 %v342
      %v413 = vpop.f32.mrf.mxu0
      %v414 = vadd.f32 %v247, %v413
      %v415 = vpop.f32.mrf.mxu0
      %416 = vdwg.mxu0
      %v417 = vmax.f32 %v414, 0.0
      %v418 = vadd.f32 %v340, %v417
      %v419 = vxor.u32 %v418, 2147483648
      %v420 = vmul.f32 %v419, 1.442695
      %v421 = vpow.pop %v420
      %v422 = vadd.f32 %v421, 1.0
      %v423 = vrcp.pop %v422
      %v424 = vmul.f32 1.0, %v423
      %426 = vset.pattern.permute.xlu0 0
      %427 = vperm.xlu0 %426, %v424
      %v428 = vpop.permute.xlu0 %427
      %v430 = vunpack.c.l.s4 839922192
      %v431 = vunpack.c.0.s8 %v430
      %v432 = vlaneseq
      %v433 = vshrl.u32 %v432, 7
      %v434 = vsub.s32 %v431, %v433
      %v435 = vrot.slane %v428, %v434
      %v437 = vmul.f32 %v225, %v435
      %438 = vst [vmem:[%s224] sm:$0xff] %v437
      %p439 = scmp.lt.s32.totalorder %s16, 1
      %s440 = scalar_select %p439, %s16, 1
      %s441 = smul.addr %s440, 2
      %s442 = smul.addr %s441, 4
      %s443 = scalar_lea.vmem %s5, %s442
      // Predicated region
      $region41: #{channel_attention.1} parent=39 // pred_check
        %p444 = pneg %p144
      $region42: #{channel_attention.1} parent=39 // pred_check_branch
        %446 = sbr.rel (%p444) target = $region44
      $region43: #{channel_attention.1} parent=39 // pred_region
        _
      $region44: #{channel_attention.1} parent=39 // pred_fallthru
        _
    $region40: #{channel_attention.1} parent=5 // pred_fallthru
      _
    %p447 = scmp.le.s32.totalorder 2, %s11
    // Predicated region
    $region45: #{channel_attention.1} parent=5 // pred_check
      %p448 = pneg %p447
    $region46: #{channel_attention.1} parent=5 // pred_check_branch
      %450 = sbr.rel (%p448) target = $region48
    $region47: #{channel_attention.1} parent=5 // pred_region
      %s451 = ssub.s32 %s11, 2
      // Predicated region
      $region49: #{channel_attention.1} parent=47 // pred_check
        %p452 = pneg %p150
      $region50: #{channel_attention.1} parent=47 // pred_check_branch
        %454 = sbr.rel (%p452) target = $region52
      $region51: #{channel_attention.1} parent=47 // pred_region
        %p455 = scmp.lt.s32.totalorder %s17, 1
        %s456 = scalar_select %p455, %s17, 1
        %s457 = smul.addr %s456, 2
        %s458 = smul.addr %s457, 4
        %s459 = scalar_lea.vmem %s5, %s458
      $region52: #{channel_attention.1} parent=47 // pred_fallthru
        _
    $region48: #{channel_attention.1} parent=5 // pred_fallthru
      _
  $region6: #{channel_attention.1} parent=0 // loop_footer
    %s15 = sadd.s32 1, %s11
  $region7: #{channel_attention.1} parent=0 // loop_footer_branch
    %10 = sbr.rel target = $region3
  $region8: #{channel_attention.1} parent=0 // loop_exit
    _

</llo_original>
